<compile_context>
chip_gen: v5e
topology: v5e:2x2
jax: 0.10.0
libtpu: 0.0.40
codegen_flags: <defaults>
</compile_context>

<pallas_src>
import numpy as np
import jax
import jax.numpy as jnp
from jax.experimental import pallas as pl
from jax.experimental.pallas import tpu as pltpu

LANES = 512                       # lane-dense last dim (multiple of 128)
TARGET_TILE_BYTES = 2 << 20       # ~2 MiB per buffer per direction
_SMALL_FALLBACK_ELEMS = 16 * 1024 # below this, launch overhead dominates


def _sublane_align(dtype) -> int:
    """Rows-per-tile alignment so sub-32-bit dtypes pack cleanly in sublanes."""
    itemsize = jnp.dtype(dtype).itemsize
    return 8 * max(1, 4 // max(itemsize, 1))   # f32->8, bf16->16, int8->32


def _static_const_kernel(const_val):
    """Kernel with the constant baked in at trace time (no SMEM traffic)."""
    def kernel(x_ref, o_ref):
        xv = x_ref[...].astype(o_ref.dtype)
        o_ref[...] = (xv + const_val).astype(o_ref.dtype)
    return kernel


def _smem_const_kernel(c_ref, x_ref, o_ref):
    """Kernel for a runtime (traced) constant held as a (1,1) SMEM scalar."""
    c = c_ref[0, 0].astype(o_ref.dtype)
    o_ref[...] = x_ref[...].astype(o_ref.dtype) + c


def add_const(x, const, *, force_pallas=False):
    """Elementwise x + const with JAX-style type promotion."""
    x = jnp.asarray(x)
    out_dtype = jnp.result_type(x, const)
    orig_shape = x.shape
    total = int(np.prod(orig_shape)) if orig_shape else 1

    if total == 0:
        return jnp.zeros(orig_shape, out_dtype)

    if (not force_pallas) and total < _SMALL_FALLBACK_ELEMS:
        # TODO(synk): at this size the right move is letting XLA fuse this
        # single VPU op into neighbours rather than a standalone kernel.
        return (x + const).astype(out_dtype)

    # --- lay out as a lane-dense, tiling-aligned 2-D slab --------------------
    in_dtype = x.dtype
    align = max(_sublane_align(in_dtype), _sublane_align(out_dtype))
    chunk = align * LANES
    padded = ((total + chunk - 1) // chunk) * chunk

    xf = x.reshape(total)
    if padded != total:
        xf = jnp.pad(xf, (0, padded - total))
    rows = padded // LANES
    x2d = xf.reshape(rows, LANES)

    # Tile rows so each buffer is ~TARGET_TILE_BYTES (rounded to the alignment).
    bytes_per_row = LANES * max(jnp.dtype(in_dtype).itemsize,
                                jnp.dtype(out_dtype).itemsize)
    tile_r = max(align, (TARGET_TILE_BYTES // bytes_per_row) // align * align)
    tile_r = min(tile_r, rows)
    grid = (pl.cdiv(rows, tile_r),)

    x_spec = pl.BlockSpec((tile_r, LANES), lambda i: (i, 0))
    out_spec = pl.BlockSpec((tile_r, LANES), lambda i: (i, 0))
    out_shape = jax.ShapeDtypeStruct((rows, LANES), out_dtype)
    cparams = pltpu.CompilerParams(dimension_semantics=("parallel",))

    static_const = isinstance(const, (bool, int, float, np.generic))

    if static_const:
        out2d = pl.pallas_call(
            _static_const_kernel(const),
            out_shape=out_shape,
            grid_spec=pl.GridSpec(grid=grid, in_specs=[x_spec], out_specs=out_spec),
            compiler_params=cparams,
        )(x2d)
    else:
        # Runtime constant: stage through SMEM as f32, cast in-kernel.
        c = jnp.asarray(const, dtype=jnp.float32).reshape(1, 1)
        out2d = pl.pallas_call(
            _smem_const_kernel,
            out_shape=out_shape,
            grid_spec=pl.GridSpec(
                grid=grid,
                in_specs=[pl.BlockSpec(memory_space=pltpu.SMEM), x_spec],
                out_specs=out_spec,
            ),
            compiler_params=cparams,
        )(c, x2d)

    out_flat = out2d.reshape(padded)
    if padded != total:
        out_flat = out_flat[:total]
    return out_flat.reshape(orig_shape)


class AddConst:
    """JAX/Pallas mirror of the PyTorch AddConst module (rule='gradient')."""

    def __init__(self):
        self.rule = "gradient"

    def __call__(self, input1, const, **kwargs):
        return add_const(input1, const,
                         force_pallas=kwargs.get("force_pallas", False))


if __name__ == "__main__":
    key = jax.random.PRNGKey(0)
    # NCHW input, small shape consistent with a conv-style LRP module.
    x = jax.random.normal(key, (2, 4, 16, 16), dtype=jnp.float32)
    const = 0.5

    module = AddConst()
    # Force the Pallas path even at this tiny size so the kernel is exercised.
    out = module(x, const, force_pallas=True)
    out = jax.block_until_ready(out)

    ref = x + const
    assert out.shape == x.shape
    assert out.dtype == ref.dtype
    assert jnp.allclose(out, ref, atol=1e-6), "mismatch vs reference (static const)"

    # Also exercise the dynamic-const (SMEM) path once.
    out2 = add_const(x, jnp.asarray(0.5, jnp.float32), force_pallas=True)
    out2 = jax.block_until_ready(out2)
    assert jnp.allclose(out2, ref, atol=1e-6), "mismatch vs reference (SMEM const)"

    print("KERNEL_OK")
</pallas_src>

<mosaic_0001>
module attributes {stable_mosaic.version = 11 : i64} {
  func.func @kernel(%arg0: i32, %arg1: memref<8x512xf32, #tpu.memory_space<vmem>>, %arg2: memref<8x512xf32, #tpu.memory_space<vmem>>) attributes {dimension_semantics = [#tpu.dimension_semantics<parallel>], iteration_bounds = array<i64: 1>, scalar_prefetch = 0 : i64, scratch_operands = 0 : i64, tpu.core_type = #tpu.core_type<tc>, window_params = [{transform_indices = @transform_0, window_bounds = array<i64: 8, 512>}, {transform_indices = @transform_1, window_bounds = array<i64: 8, 512>}]} {
    %c0 = arith.constant 0 : index
    %c0_0 = arith.constant 0 : index
    %0 = vector.load %arg1[%c0, %c0_0] : memref<8x512xf32, #tpu.memory_space<vmem>>, vector<8x512xf32>
    %cst = arith.constant 5.000000e-01 : f32
    %1 = vector.broadcast %cst : f32 to vector<8x512xf32>
    %2 = arith.addf %0, %1 : vector<8x512xf32>
    %c0_1 = arith.constant 0 : index
    %c0_2 = arith.constant 0 : index
    %3 = vector.load %arg2[%c0_1, %c0_2] : memref<8x512xf32, #tpu.memory_space<vmem>>, vector<8x512xf32>
    tpu.vector_store %arg2[%c0_1, %c0_2], %2 {strides = array<i32>} : memref<8x512xf32, #tpu.memory_space<vmem>>, vector<8x512xf32>,
    return
  }
  func.func @transform_0(%arg0: i32) -> (i32, i32) {
    %c0_i32 = arith.constant 0 : i32
    %c0_i32_0 = arith.constant 0 : i32
    return %arg0, %c0_i32 : i32, i32
  }
  func.func @transform_1(%arg0: i32) -> (i32, i32) {
    %c0_i32 = arith.constant 0 : i32
    %c0_i32_0 = arith.constant 0 : i32
    return %arg0, %c0_i32 : i32, i32
  }
}

</mosaic_0001>

<llo_original>
// kernel: tpu_custom_call.1
$region0: #{tpu_custom_call.1}
  #allocation0 [shape = 'u32[]', space=smem, size = 0x4, offset = 0x4, fixed_abs, tag = 'smem constant byte address 0x4 - core index']
  #allocation1 [shape = 'u32[72,128]{1,0:T(1,128)}', space=vmem, size = 0x9000, scoped, tag = 'internal scratch']
  %s0 = inlined_call_operand.hbm [shape: f32[8,512], index: 0, kind: input, shape index: {}]
  %s1 = inlined_call_operand.hbm [shape: f32[8,512], index: 1, kind: output, shape index: {}]
  %s2 = sld [smem:[#allocation0]]
  $region18: #{tpu_custom_call.1} parent=0
    _
  %s4 = ssub.s32 1, %s2
  %s5 = scalar_select 0, %s4, %s2
  $region1: #{tpu_custom_call.1} parent=0
    #allocation2 [shape = 'u8[16384]{0}', space=vmem, size = 0x4000, scoped, tag = 'input window, operand 0, single buffered']
    #allocation3 [shape = 's32[1]{0}', space=sflag, size = 0x4, scoped, tag = 'scoped memory for tpu_custom_call.1']
    #allocation4 [shape = 's32[1]{0}', space=sflag, size = 0x4, scoped, tag = 'scoped memory for tpu_custom_call.1']
    #allocation5 [shape = 'u8[16384]{0}', space=vmem, size = 0x4000, scoped, tag = 'output window, operand 0, single buffered']
    %6 = vsyncpa [#allocation3], 0
    %7 = vsyncpa [#allocation4], 0
    // Predicated region
    $region2: #{tpu_custom_call.1} parent=1 // pred_check
      _
    $region3: #{tpu_custom_call.1} parent=1 // pred_check_branch
      %9 = sbr.rel (0) target = $region5
    $region4: #{tpu_custom_call.1} parent=1 // pred_region
      %11 = vsyncadd [#allocation3], 0
      %s13 = sshll.u32 %s0, 4
      %s14 = int_to_ptr.hbm [resolvable:$true] %s13
      %s15 = sshll.u32 [#allocation2], 4
      %s16 = int_to_ptr.vmem [resolvable:$true] %s15
      %18 = dma.hbm_to_vmem [thread:$0]  %s14, 512, %s16, [#allocation3]
    $region5: #{tpu_custom_call.1} parent=1 // pred_fallthru
      _
    // Predicated region
    $region6: #{tpu_custom_call.1} parent=1 // pred_check
      _
    $region7: #{tpu_custom_call.1} parent=1 // pred_check_branch
      %20 = sbr.rel (0) target = $region9
    $region8: #{tpu_custom_call.1} parent=1 // pred_region
      %22 = dma.done [#allocation3], 512
    $region9: #{tpu_custom_call.1} parent=1 // pred_fallthru
      _
    %v23 = vld [vmem:[#allocation2] sm:$0xff]
    %v24 = vld [vmem:[#allocation2 + $0x8] sm:$0xff]
    %v25 = vld [vmem:[#allocation2 + $0x10] sm:$0xff]
    %v26 = vld [vmem:[#allocation2 + $0x18] sm:$0xff]
    %v27 = vadd.f32 %v23, 0.5
    %v28 = vadd.f32 %v24, 0.5
    %v29 = vadd.f32 %v25, 0.5
    %v30 = vadd.f32 %v26, 0.5
    %31 = vst [vmem:[#allocation5] sm:$0xff] %v27
    %32 = vst [vmem:[#allocation5 + $0x8] sm:$0xff] %v28
    %33 = vst [vmem:[#allocation5 + $0x10] sm:$0xff] %v29
    %34 = vst [vmem:[#allocation5 + $0x18] sm:$0xff] %v30
    // Predicated region
    $region10: #{tpu_custom_call.1} parent=1 // pred_check
      _
    $region11: #{tpu_custom_call.1} parent=1 // pred_check_branch
      %36 = sbr.rel (0) target = $region13
    $region12: #{tpu_custom_call.1} parent=1 // pred_region
      %38 = vsyncadd [#allocation4], 0
      %s40 = sshll.u32 [#allocation5], 4
      %s41 = int_to_ptr.vmem [resolvable:$true] %s40
      %s42 = sshll.u32 %s1, 4
      %s43 = int_to_ptr.hbm [resolvable:$true] %s42
      %45 = dma.vmem_to_hbm [thread:$0]  %s41, 512, %s43, [#allocation4]
    $region13: #{tpu_custom_call.1} parent=1 // pred_fallthru
      _
    // Predicated region
    $region14: #{tpu_custom_call.1} parent=1 // pred_check
      _
    $region15: #{tpu_custom_call.1} parent=1 // pred_check_branch
      %47 = sbr.rel (0) target = $region17
    $region16: #{tpu_custom_call.1} parent=1 // pred_region
      %49 = dma.done [#allocation4], 512
    $region17: #{tpu_custom_call.1} parent=1 // pred_fallthru
      _
    %50 = vsyncpa [#allocation3], 1
    %51 = vsyncpa [#allocation4], 1

</llo_original>
